<compile_context>
chip_gen: v7x
topology: tpu7x:2x2x1
jax: 0.10.0
libtpu: 0.0.40
codegen_flags: <defaults>
</compile_context>

<pallas_src>
import jax
import jax.numpy as jnp
from jax.experimental import pallas as pl
from jax.experimental.pallas import tpu as pltpu

HIDDEN = 64  # DQNNetwork hidden size (nn.Linear(state_dims, 64), nn.Linear(64, 64))


def _round_up(n, m):
    return ((n + m - 1) // m) * m


def _choose_tiling(B, block_b):
    """Pick (row_tile, padded_batch).  Pad only to the f32 sublane multiple (8); aim for
    >=4 tiles when B is large (v7x megacore + pipelining), tiles in [128, block_b] rows."""
    b8 = _round_up(max(B, 1), 8)
    tb = min(block_b, max(128, _round_up(pl.cdiv(b8, 4), 8)))
    if tb >= b8:
        tb = b8                      # small batch: single tile, zero extra padding
    b_pad = _round_up(b8, tb)
    return tb, b_pad


def dqn_kernel(x_ref, w1_ref, b1_ref, w2_ref, b2_ref, w3_ref, b3_ref, q_ref):
    # fc1 + ReLU: bf16 operands into the MXU, f32 accumulate; bias/ReLU in f32 on the VPU.
    x = x_ref[...].astype(jnp.bfloat16)                                  # (tb, state_dims)
    h1 = jnp.dot(x, w1_ref[...].astype(jnp.bfloat16),
                 preferred_element_type=jnp.float32) + b1_ref[...]
    h1 = jnp.maximum(h1, 0.0)
    # fc2 + ReLU
    h2 = jnp.dot(h1.astype(jnp.bfloat16), w2_ref[...].astype(jnp.bfloat16),
                 preferred_element_type=jnp.float32) + b2_ref[...]
    h2 = jnp.maximum(h2, 0.0)
    # q_values head (no activation)
    q_ref[...] = (jnp.dot(h2.astype(jnp.bfloat16), w3_ref[...].astype(jnp.bfloat16),
                          preferred_element_type=jnp.float32)
                  + b3_ref[...]).astype(q_ref.dtype)


def dqn_forward(state, params, *, block_b=1024):
    """state: (B, state_dims) f32.  Returns q_values (B, action_dims) f32."""
    B, state_dims = state.shape
    w1, b1 = params["w1"], params["b1"]
    w2, b2 = params["w2"], params["b2"]
    w3, b3 = params["w3"], params["b3"]
    assert w1.shape[0] == state_dims
    hidden = w1.shape[1]
    action_dims = w3.shape[1]

    tb, b_pad = _choose_tiling(B, block_b)
    x = state if b_pad == B else jnp.pad(state, ((0, b_pad - B), (0, 0)))

    const = lambda i: (0, 0)   # weights/biases: same block every step -> VMEM-resident

    q = pl.pallas_call(
        dqn_kernel,
        out_shape=jax.ShapeDtypeStruct((b_pad, action_dims), jnp.float32),
        grid_spec=pltpu.PrefetchScalarGridSpec(
            num_scalar_prefetch=0,
            grid=(b_pad // tb,),
            in_specs=[
                # last dim == full array dim, so narrow (non-128) lanes are legal
                pl.BlockSpec((tb, state_dims), lambda i: (i, 0)),      # x (batch-tiled)
                pl.BlockSpec((state_dims, hidden), const),             # w1
                pl.BlockSpec((1, hidden), const),                      # b1
                pl.BlockSpec((hidden, hidden), const),                 # w2
                pl.BlockSpec((1, hidden), const),                      # b2
                pl.BlockSpec((hidden, action_dims), const),            # w3
                pl.BlockSpec((1, action_dims), const),                 # b3
            ],
            out_specs=pl.BlockSpec((tb, action_dims), lambda i: (i, 0)),
        ),
        compiler_params=pltpu.CompilerParams(
            dimension_semantics=("parallel",),   # shard batch tiles over both TCs on v7x
        ),
    )(x, w1, b1, w2, b2, w3, b3)

    return q if b_pad == B else q[:B]


def init_params(key, state_dims, action_dims, hidden=HIDDEN):
    """PyTorch nn.Linear-style init U(-1/sqrt(fan_in), +1/sqrt(fan_in)).
    Weights stored f32 with shape (in_features, out_features) == W_pt.T,
    so the kernel computes x @ W + b, matching F.linear(x, W_pt, b)."""
    ks = jax.random.split(key, 6)

    def linear(kw, kb, fan_in, fan_out):
        bound = 1.0 / jnp.sqrt(jnp.float32(fan_in))
        w = jax.random.uniform(kw, (fan_in, fan_out), jnp.float32, -bound, bound)
        b = jax.random.uniform(kb, (1, fan_out), jnp.float32, -bound, bound)
        return w, b

    w1, b1 = linear(ks[0], ks[1], state_dims, hidden)
    w2, b2 = linear(ks[2], ks[3], hidden, hidden)
    w3, b3 = linear(ks[4], ks[5], hidden, action_dims)
    return {"w1": w1, "b1": b1, "w2": w2, "b2": b2, "w3": w3, "b3": b3,
            "state_dims": state_dims, "action_dims": action_dims}


def reference_forward(state, p):
    """Pure-JAX reference mirroring the kernel's dtype path (bf16 dot operands, f32 acc)."""
    def mm(a, w):
        return jnp.dot(a.astype(jnp.bfloat16), w.astype(jnp.bfloat16),
                       preferred_element_type=jnp.float32)
    h1 = jnp.maximum(mm(state, p["w1"]) + p["b1"], 0.0)
    h2 = jnp.maximum(mm(h1, p["w2"]) + p["b2"], 0.0)
    return mm(h2, p["w3"]) + p["b3"]


# TODO(synk): Adam optimizer / .to(device) from the PyTorch module are training plumbing,
# not part of forward(), and are intentionally not translated.
# TODO(synk): for a tight per-env-step B~8 action-selection loop, cross-call weight
# residency (P10 semaphore/VMEM futures) or fusing the downstream argmax would be the
# next lever; out of scope for this forward-only kernel.

if __name__ == "__main__":
    key = jax.random.PRNGKey(0)
    k_params, k_state = jax.random.split(key)

    batch = 8
    state_dims = 16
    action_dims = 8

    params = init_params(k_params, state_dims, action_dims)
    state = jax.random.normal(k_state, (batch, state_dims), jnp.float32)

    q = dqn_forward(state, params)
    jax.block_until_ready(q)

    q_ref = reference_forward(state, params)
    assert q.shape == (batch, action_dims)
    assert jnp.allclose(q, q_ref, atol=1e-3, rtol=1e-3), "mismatch vs reference"

    print("KERNEL_OK")
</pallas_src>

<mosaic_0001>
module attributes {stable_mosaic.version = 11 : i64} {
  func.func @dqn_kernel(%arg0: i32, %arg1: memref<8x16xf32, #tpu.memory_space<vmem>>, %arg2: memref<16x64xf32, #tpu.memory_space<vmem>>, %arg3: memref<1x64xf32, #tpu.memory_space<vmem>>, %arg4: memref<64x64xf32, #tpu.memory_space<vmem>>, %arg5: memref<1x64xf32, #tpu.memory_space<vmem>>, %arg6: memref<64x8xf32, #tpu.memory_space<vmem>>, %arg7: memref<1x8xf32, #tpu.memory_space<vmem>>, %arg8: memref<8x8xf32, #tpu.memory_space<vmem>>) attributes {dimension_semantics = [#tpu.dimension_semantics<parallel>], iteration_bounds = array<i64: 1>, scalar_prefetch = 0 : i64, scratch_operands = 0 : i64, tpu.core_type = #tpu.core_type<tc>, window_params = [{transform_indices = @transform_0, window_bounds = array<i64: 8, 16>}, {pipeline_mode = #tpu.pipeline_mode<synchronous>, transform_indices = @transform_1, window_bounds = array<i64: 16, 64>}, {pipeline_mode = #tpu.pipeline_mode<synchronous>, transform_indices = @transform_2, window_bounds = array<i64: 1, 64>}, {pipeline_mode = #tpu.pipeline_mode<synchronous>, transform_indices = @transform_3, window_bounds = array<i64: 64, 64>}, {pipeline_mode = #tpu.pipeline_mode<synchronous>, transform_indices = @transform_4, window_bounds = array<i64: 1, 64>}, {pipeline_mode = #tpu.pipeline_mode<synchronous>, transform_indices = @transform_5, window_bounds = array<i64: 64, 8>}, {pipeline_mode = #tpu.pipeline_mode<synchronous>, transform_indices = @transform_6, window_bounds = array<i64: 1, 8>}, {transform_indices = @transform_7, window_bounds = array<i64: 8, 8>}]} {
    %c0 = arith.constant 0 : index
    %c0_0 = arith.constant 0 : index
    %0 = vector.load %arg1[%c0, %c0_0] : memref<8x16xf32, #tpu.memory_space<vmem>>, vector<8x16xf32>
    %1 = arith.truncf %0 : vector<8x16xf32> to vector<8x16xbf16>
    %c0_1 = arith.constant 0 : index
    %c0_2 = arith.constant 0 : index
    %2 = vector.load %arg2[%c0_1, %c0_2] : memref<16x64xf32, #tpu.memory_space<vmem>>, vector<16x64xf32>
    %3 = arith.truncf %2 : vector<16x64xf32> to vector<16x64xbf16>
    %cst = arith.constant dense<0.000000e+00> : vector<8x64xf32>
    %4 = tpu.matmul %1, %3, %cst {dimension_numbers = #tpu.dot_dimension_numbers<[1], [0], [0], [1], [0, 0, 1, 1], [], []>} : vector<8x16xbf16>, vector<16x64xbf16>, vector<8x64xf32> -> vector<8x64xf32>
    %c0_3 = arith.constant 0 : index
    %c0_4 = arith.constant 0 : index
    %5 = vector.load %arg3[%c0_3, %c0_4] : memref<1x64xf32, #tpu.memory_space<vmem>>, vector<1x64xf32>
    %6 = vector.broadcast %5 : vector<1x64xf32> to vector<8x64xf32>
    %7 = arith.addf %4, %6 : vector<8x64xf32>
    %cst_5 = arith.constant 0.000000e+00 : f32
    %8 = vector.broadcast %cst_5 : f32 to vector<8x64xf32>
    %9 = arith.maximumf %7, %8 : vector<8x64xf32>
    %10 = arith.truncf %9 : vector<8x64xf32> to vector<8x64xbf16>
    %c0_6 = arith.constant 0 : index
    %c0_7 = arith.constant 0 : index
    %11 = vector.load %arg4[%c0_6, %c0_7] : memref<64x64xf32, #tpu.memory_space<vmem>>, vector<64x64xf32>
    %12 = arith.truncf %11 : vector<64x64xf32> to vector<64x64xbf16>
    %cst_8 = arith.constant dense<0.000000e+00> : vector<8x64xf32>
    %13 = tpu.matmul %10, %12, %cst_8 {dimension_numbers = #tpu.dot_dimension_numbers<[1], [0], [0], [1], [0, 0, 1, 1], [], []>} : vector<8x64xbf16>, vector<64x64xbf16>, vector<8x64xf32> -> vector<8x64xf32>
    %c0_9 = arith.constant 0 : index
    %c0_10 = arith.constant 0 : index
    %14 = vector.load %arg5[%c0_9, %c0_10] : memref<1x64xf32, #tpu.memory_space<vmem>>, vector<1x64xf32>
    %15 = vector.broadcast %14 : vector<1x64xf32> to vector<8x64xf32>
    %16 = arith.addf %13, %15 : vector<8x64xf32>
    %cst_11 = arith.constant 0.000000e+00 : f32
    %17 = vector.broadcast %cst_11 : f32 to vector<8x64xf32>
    %18 = arith.maximumf %16, %17 : vector<8x64xf32>
    %19 = arith.truncf %18 : vector<8x64xf32> to vector<8x64xbf16>
    %c0_12 = arith.constant 0 : index
    %c0_13 = arith.constant 0 : index
    %20 = vector.load %arg6[%c0_12, %c0_13] : memref<64x8xf32, #tpu.memory_space<vmem>>, vector<64x8xf32>
    %21 = arith.truncf %20 : vector<64x8xf32> to vector<64x8xbf16>
    %cst_14 = arith.constant dense<0.000000e+00> : vector<8x8xf32>
    %22 = tpu.matmul %19, %21, %cst_14 {dimension_numbers = #tpu.dot_dimension_numbers<[1], [0], [0], [1], [0, 0, 1, 1], [], []>} : vector<8x64xbf16>, vector<64x8xbf16>, vector<8x8xf32> -> vector<8x8xf32>
    %c0_15 = arith.constant 0 : index
    %c0_16 = arith.constant 0 : index
    %23 = vector.load %arg7[%c0_15, %c0_16] : memref<1x8xf32, #tpu.memory_space<vmem>>, vector<1x8xf32>
    %24 = vector.broadcast %23 : vector<1x8xf32> to vector<8x8xf32>
    %25 = arith.addf %22, %24 : vector<8x8xf32>
    %c0_17 = arith.constant 0 : index
    %c0_18 = arith.constant 0 : index
    %26 = vector.load %arg8[%c0_17, %c0_18] : memref<8x8xf32, #tpu.memory_space<vmem>>, vector<8x8xf32>
    tpu.vector_store %arg8[%c0_17, %c0_18], %25 {strides = array<i32>} : memref<8x8xf32, #tpu.memory_space<vmem>>, vector<8x8xf32>,
    return
  }
  func.func @transform_0(%arg0: i32) -> (i32, i32) {
    %c0_i32 = arith.constant 0 : i32
    %c0_i32_0 = arith.constant 0 : i32
    return %arg0, %c0_i32 : i32, i32
  }
  func.func @transform_1(%arg0: i32) -> (i32, i32) {
    %c0_i32 = arith.constant 0 : i32
    %c0_i32_0 = arith.constant 0 : i32
    %c0_i32_1 = arith.constant 0 : i32
    return %c0_i32, %c0_i32_0 : i32, i32
  }
  func.func @transform_2(%arg0: i32) -> (i32, i32) {
    %c0_i32 = arith.constant 0 : i32
    %c0_i32_0 = arith.constant 0 : i32
    %c0_i32_1 = arith.constant 0 : i32
    return %c0_i32, %c0_i32_0 : i32, i32
  }
  func.func @transform_3(%arg0: i32) -> (i32, i32) {
    %c0_i32 = arith.constant 0 : i32
    %c0_i32_0 = arith.constant 0 : i32
    %c0_i32_1 = arith.constant 0 : i32
    return %c0_i32, %c0_i32_0 : i32, i32
  }
  func.func @transform_4(%arg0: i32) -> (i32, i32) {
    %c0_i32 = arith.constant 0 : i32
    %c0_i32_0 = arith.constant 0 : i32
    %c0_i32_1 = arith.constant 0 : i32
    return %c0_i32, %c0_i32_0 : i32, i32
  }
  func.func @transform_5(%arg0: i32) -> (i32, i32) {
    %c0_i32 = arith.constant 0 : i32
    %c0_i32_0 = arith.constant 0 : i32
    %c0_i32_1 = arith.constant 0 : i32
    return %c0_i32, %c0_i32_0 : i32, i32
  }
  func.func @transform_6(%arg0: i32) -> (i32, i32) {
    %c0_i32 = arith.constant 0 : i32
    %c0_i32_0 = arith.constant 0 : i32
    %c0_i32_1 = arith.constant 0 : i32
    return %c0_i32, %c0_i32_0 : i32, i32
  }
  func.func @transform_7(%arg0: i32) -> (i32, i32) {
    %c0_i32 = arith.constant 0 : i32
    %c0_i32_0 = arith.constant 0 : i32
    return %arg0, %c0_i32 : i32, i32
  }
}

</mosaic_0001>

<llo_original>
// kernel: tpu_custom_call.1
$region0: #{tpu_custom_call.1}
  #allocation0 [shape = 'u32[]', space=smem, size = 0x4, offset = 0x4, fixed_abs, tag = 'smem constant byte address 0x4 - core index']
  #allocation1 [shape = 'u32[144,128]{1,0:T(1,128)}', space=vmem, size = 0x12000, scoped, tag = 'internal scratch']
  %s0 = inlined_call_operand.hbm [shape: f32[8,16], index: 0, kind: input, shape index: {}]
  %s1 = inlined_call_operand.vmem [shape: f32[16,64], index: 1, kind: input, shape index: {}]
  %s2 = inlined_call_operand.vmem [shape: f32[1,64], index: 2, kind: input, shape index: {}]
  %s3 = inlined_call_operand.vmem [shape: f32[64,64], index: 3, kind: input, shape index: {}]
  %s4 = inlined_call_operand.vmem [shape: f32[1,64], index: 4, kind: input, shape index: {}]
  %s5 = inlined_call_operand.vmem [shape: f32[64,8], index: 5, kind: input, shape index: {}]
  %s6 = inlined_call_operand.vmem [shape: f32[1,8], index: 6, kind: input, shape index: {}]
  %s7 = inlined_call_operand.hbm [shape: f32[8,8], index: 7, kind: output, shape index: {}]
  %s8 = sld [smem:[#allocation0]]
  $region42: #{tpu_custom_call.1} parent=0
    _
  %s10 = ssub.s32 1, %s8
  %s11 = scalar_select 0, %s10, %s8
  $region1: #{tpu_custom_call.1} parent=0
    #allocation2 [shape = 'u8[4096]{0}', space=vmem, size = 0x1000, scoped, tag = 'input window, operand 0, single buffered']
    #allocation3 [shape = 's32[1]{0}', space=sflag, size = 0x4, scoped, tag = 'scoped memory for tpu_custom_call.1']
    #allocation4 [shape = 's32[1]{0}', space=sflag, size = 0x4, scoped, tag = 'scoped memory for tpu_custom_call.1']
    #allocation5 [shape = 'u8[4096]{0}', space=vmem, size = 0x1000, scoped, tag = 'output window, operand 0, single buffered']
    %12 = vsyncpa [#allocation3], 0
    %13 = vsyncpa [#allocation4], 0
    // Predicated region
    $region2: #{tpu_custom_call.1} parent=1 // pred_check
      _
    $region3: #{tpu_custom_call.1} parent=1 // pred_check_branch
      %15 = sbr.rel (0) target = $region5
    $region4: #{tpu_custom_call.1} parent=1 // pred_region
      %s17 = ssub.s32 128, 128
      %18 = vsyncadd [#allocation3], %s17
      %s20 = sshll.u32 [#allocation2], 4
      %s21 = int_to_ptr.vmem [resolvable:$true] %s20
      %23 = dma.hbm_to_vmem [thread:$0]  %s0, 128, %s21, [#allocation3]
    $region5: #{tpu_custom_call.1} parent=1 // pred_fallthru
      _
    // Predicated region
    $region6: #{tpu_custom_call.1} parent=1 // pred_check
      _
    $region7: #{tpu_custom_call.1} parent=1 // pred_check_branch
      %25 = sbr.rel (0) target = $region9
    $region8: #{tpu_custom_call.1} parent=1 // pred_region
      _
    $region9: #{tpu_custom_call.1} parent=1 // pred_fallthru
      _
    // Predicated region
    $region10: #{tpu_custom_call.1} parent=1 // pred_check
      _
    $region11: #{tpu_custom_call.1} parent=1 // pred_check_branch
      %27 = sbr.rel (0) target = $region13
    $region12: #{tpu_custom_call.1} parent=1 // pred_region
      _
    $region13: #{tpu_custom_call.1} parent=1 // pred_fallthru
      _
    // Predicated region
    $region14: #{tpu_custom_call.1} parent=1 // pred_check
      _
    $region15: #{tpu_custom_call.1} parent=1 // pred_check_branch
      %29 = sbr.rel (0) target = $region17
    $region16: #{tpu_custom_call.1} parent=1 // pred_region
      _
    $region17: #{tpu_custom_call.1} parent=1 // pred_fallthru
      _
    // Predicated region
    $region18: #{tpu_custom_call.1} parent=1 // pred_check
      _
    $region19: #{tpu_custom_call.1} parent=1 // pred_check_branch
      %31 = sbr.rel (0) target = $region21
    $region20: #{tpu_custom_call.1} parent=1 // pred_region
      _
    $region21: #{tpu_custom_call.1} parent=1 // pred_fallthru
      _
    // Predicated region
    $region22: #{tpu_custom_call.1} parent=1 // pred_check
      _
    $region23: #{tpu_custom_call.1} parent=1 // pred_check_branch
      %33 = sbr.rel (0) target = $region25
    $region24: #{tpu_custom_call.1} parent=1 // pred_region
      _
    $region25: #{tpu_custom_call.1} parent=1 // pred_fallthru
      _
    // Predicated region
    $region26: #{tpu_custom_call.1} parent=1 // pred_check
      _
    $region27: #{tpu_custom_call.1} parent=1 // pred_check_branch
      %35 = sbr.rel (0) target = $region29
    $region28: #{tpu_custom_call.1} parent=1 // pred_region
      _
    $region29: #{tpu_custom_call.1} parent=1 // pred_fallthru
      _
    // Predicated region
    $region30: #{tpu_custom_call.1} parent=1 // pred_check
      _
    $region31: #{tpu_custom_call.1} parent=1 // pred_check_branch
      %37 = sbr.rel (0) target = $region33
    $region32: #{tpu_custom_call.1} parent=1 // pred_region
      %38 = dma.done [#allocation3], 128
    $region33: #{tpu_custom_call.1} parent=1 // pred_fallthru
      _
    %v40 = vld [vmem:[#allocation2] sm:$0xff]
    %v41 = vpack.c.bf16 %v40, %v40
    %v42 = vld [vmem:[%s1] sm:$0xff]
    %v43 = vld [vmem:[%s1 + $0x8] sm:$0xff]
    %v44 = vpack.c.bf16 %v43, %v42
    %v45 = vld [vmem:[%s2] sm:$0x1]
    %v47 = vlaneseq
    %v48 = vshrl.u32 %v47, 7
    %v49 = vsub.s32 0, %v48
    %v50 = vrot.slane %v45, %v49
    %vm52 = vcmask 130048
    %v54 = vsel %vm52, %v41, 0
    %56 = vmatprep.subr.bf16.mxu0 0
    %57 = vmatpush1.bf16.msra.mxu0 %v44
    %58 = vmatprep.subr.bf16.mxu0 0
    %59 = vmatpush1.bf16.msra.mxu0 0
    %60 = vmatprep.subr.bf16.mxu0 0
    %61 = vmatpush1.bf16.msra.mxu0 0
    %62 = vmatprep.subr.bf16.mxu0 0
    %63 = vmatpush1.bf16.msra.mxu0 0
    %64 = vmatprep.subr.bf16.mxu0 0
    %65 = vmatpush1.bf16.msra.mxu0 0
    %66 = vmatprep.subr.bf16.mxu0 0
    %67 = vmatpush1.bf16.msra.mxu0 0
    %68 = vmatprep.subr.bf16.mxu0 0
    %69 = vmatpush1.bf16.msra.mxu0 0
    %70 = vmatprep.subr.bf16.mxu0 0
    %71 = vmatpush1.bf16.msra.mxu0 0
    %72 = vmatprep.subr.bf16.mxu0 0
    %73 = vmatpush1.bf16.msra.mxu0 0
    %74 = vmatprep.subr.bf16.mxu0 0
    %75 = vmatpush1.bf16.msra.mxu0 0
    %76 = vmatprep.subr.bf16.mxu0 0
    %77 = vmatpush1.bf16.msra.mxu0 0
    %78 = vmatprep.subr.bf16.mxu0 0
    %79 = vmatpush1.bf16.msra.mxu0 0
    %80 = vmatprep.subr.bf16.mxu0 0
    %81 = vmatpush1.bf16.msra.mxu0 0
    %82 = vmatprep.subr.bf16.mxu0 0
    %83 = vmatpush1.bf16.msra.mxu0 0
    %84 = vmatprep.subr.bf16.mxu0 0
    %85 = vmatpush1.bf16.msra.mxu0 0
    %86 = vmatprep.subr.bf16.mxu0 0
    %87 = vmatpush1.bf16.msra.mxu0 0
    %88 = vmatprep.mubr.bf16.mxu0 0
    %89 = vmatmul.mubr.bf16.gmra.mrb[0].mxu0 %v54
    %v90 = vpop.f32.mrb[0].mxu0
    %v91 = vadd.f32 %v50, %v90
    %v92 = vpop.f32.mrb[0].mxu0
    %v93 = vpop.f32.mrb[0].mxu0
    %v94 = vpop.f32.mrb[0].mxu0
    %95 = vdwg.mxu0
    %v96 = vmax.f32 %v91, 0.0
    %v97 = vpack.c.bf16 %v96, %v96
    %v98 = vld [vmem:[%s3] sm:$0xff]
    %v99 = vld [vmem:[%s3 + $0x8] sm:$0xff]
    %v100 = vld [vmem:[%s3 + $0x10] sm:$0xff]
    %v101 = vld [vmem:[%s3 + $0x18] sm:$0xff]
    %v102 = vld [vmem:[%s3 + $0x20] sm:$0xff]
    %v103 = vld [vmem:[%s3 + $0x28] sm:$0xff]
    %v104 = vld [vmem:[%s3 + $0x30] sm:$0xff]
    %v105 = vld [vmem:[%s3 + $0x38] sm:$0xff]
    %v106 = vpack.c.bf16 %v99, %v98
    %v107 = vpack.c.bf16 %v101, %v100
    %v108 = vpack.c.bf16 %v103, %v102
    %v109 = vpack.c.bf16 %v105, %v104
    %v110 = vld [vmem:[%s4] sm:$0x1]
    %v112 = vlaneseq
    %v113 = vshrl.u32 %v112, 7
    %v114 = vsub.s32 0, %v113
    %v115 = vrot.slane %v110, %v114
    %vm117 = vcmask 523264
    %v119 = vsel %vm117, %v97, 0
    %121 = vmatprep.subr.bf16.mxu0 0
    %122 = vmatpush1.bf16.msra.mxu0 %v106
    %123 = vmatprep.subr.bf16.mxu0 0
    %124 = vmatpush1.bf16.msra.mxu0 %v107
    %125 = vmatprep.subr.bf16.mxu0 0
    %126 = vmatpush1.bf16.msra.mxu0 %v108
    %127 = vmatprep.subr.bf16.mxu0 0
    %128 = vmatpush1.bf16.msra.mxu0 %v109
    %129 = vmatprep.subr.bf16.mxu0 0
    %130 = vmatpush1.bf16.msra.mxu0 0
    %131 = vmatprep.subr.bf16.mxu0 0
    %132 = vmatpush1.bf16.msra.mxu0 0
    %133 = vmatprep.subr.bf16.mxu0 0
    %134 = vmatpush1.bf16.msra.mxu0 0
    %135 = vmatprep.subr.bf16.mxu0 0
    %136 = vmatpush1.bf16.msra.mxu0 0
    %137 = vmatprep.subr.bf16.mxu0 0
    %138 = vmatpush1.bf16.msra.mxu0 0
    %139 = vmatprep.subr.bf16.mxu0 0
    %140 = vmatpush1.bf16.msra.mxu0 0
    %141 = vmatprep.subr.bf16.mxu0 0
    %142 = vmatpush1.bf16.msra.mxu0 0
    %143 = vmatprep.subr.bf16.mxu0 0
    %144 = vmatpush1.bf16.msra.mxu0 0
    %145 = vmatprep.subr.bf16.mxu0 0
    %146 = vmatpush1.bf16.msra.mxu0 0
    %147 = vmatprep.subr.bf16.mxu0 0
    %148 = vmatpush1.bf16.msra.mxu0 0
    %149 = vmatprep.subr.bf16.mxu0 0
    %150 = vmatpush1.bf16.msra.mxu0 0
    %151 = vmatprep.subr.bf16.mxu0 0
    %152 = vmatpush1.bf16.msra.mxu0 0
    %153 = vmatprep.mubr.bf16.mxu0 0
    %154 = vmatmul.mubr.bf16.gmra.mrb[0].mxu0 %v119
    %v155 = vpop.f32.mrb[0].mxu0
    %v156 = vadd.f32 %v115, %v155
    %v157 = vpop.f32.mrb[0].mxu0
    %v158 = vpop.f32.mrb[0].mxu0
    %v159 = vpop.f32.mrb[0].mxu0
    %160 = vdwg.mxu0
    %v161 = vmax.f32 %v156, 0.0
    %v162 = vpack.c.bf16 %v161, %v161
    %v163 = vld [vmem:[%s5] sm:$0xff]
    %v164 = vld [vmem:[%s5 + $0x8] sm:$0xff]
    %v165 = vld [vmem:[%s5 + $0x10] sm:$0xff]
    %v166 = vld [vmem:[%s5 + $0x18] sm:$0xff]
    %v167 = vld [vmem:[%s5 + $0x20] sm:$0xff]
    %v168 = vld [vmem:[%s5 + $0x28] sm:$0xff]
    %v169 = vld [vmem:[%s5 + $0x30] sm:$0xff]
    %v170 = vld [vmem:[%s5 + $0x38] sm:$0xff]
    %v171 = vpack.c.bf16 %v164, %v163
    %v172 = vpack.c.bf16 %v166, %v165
    %v173 = vpack.c.bf16 %v168, %v167
    %v174 = vpack.c.bf16 %v170, %v169
    %v175 = vld [vmem:[%s6] sm:$0x1]
    %v177 = vlaneseq
    %v178 = vshrl.u32 %v177, 7
    %v179 = vsub.s32 0, %v178
    %v180 = vrot.slane %v175, %v179
    %v183 = vsel %vm117, %v162, 0
    %185 = vmatprep.subr.bf16.mxu0 0
    %186 = vmatpush1.bf16.msra.mxu0 %v171
    %187 = vmatprep.subr.bf16.mxu0 0
    %188 = vmatpush1.bf16.msra.mxu0 %v172
    %189 = vmatprep.subr.bf16.mxu0 0
    %190 = vmatpush1.bf16.msra.mxu0 %v173
    %191 = vmatprep.subr.bf16.mxu0 0
    %192 = vmatpush1.bf16.msra.mxu0 %v174
    %193 = vmatprep.subr.bf16.mxu0 0
    %194 = vmatpush1.bf16.msra.mxu0 0
    %195 = vmatprep.subr.bf16.mxu0 0
    %196 = vmatpush1.bf16.msra.mxu0 0
    %197 = vmatprep.subr.bf16.mxu0 0
    %198 = vmatpush1.bf16.msra.mxu0 0
    %199 = vmatprep.subr.bf16.mxu0 0
    %200 = vmatpush1.bf16.msra.mxu0 0
    %201 = vmatprep.subr.bf16.mxu0 0
    %202 = vmatpush1.bf16.msra.mxu0 0
    %203 = vmatprep.subr.bf16.mxu0 0
    %204 = vmatpush1.bf16.msra.mxu0 0
    %205 = vmatprep.subr.bf16.mxu0 0
    %206 = vmatpush1.bf16.msra.mxu0 0
    %207 = vmatprep.subr.bf16.mxu0 0
    %208 = vmatpush1.bf16.msra.mxu0 0
    %209 = vmatprep.subr.bf16.mxu0 0
    %210 = vmatpush1.bf16.msra.mxu0 0
    %211 = vmatprep.subr.bf16.mxu0 0
    %212 = vmatpush1.bf16.msra.mxu0 0
    %213 = vmatprep.subr.bf16.mxu0 0
    %214 = vmatpush1.bf16.msra.mxu0 0
    %215 = vmatprep.subr.bf16.mxu0 0
    %216 = vmatpush1.bf16.msra.mxu0 0
    %217 = vmatprep.mubr.bf16.mxu0 0
    %218 = vmatmul.mubr.bf16.gmra.mrb[0].mxu0 %v183
    %v219 = vpop.f32.mrb[0].mxu0
    %v220 = vadd.f32 %v180, %v219
    %v221 = vpop.f32.mrb[0].mxu0
    %v222 = vpop.f32.mrb[0].mxu0
    %v223 = vpop.f32.mrb[0].mxu0
    %224 = vdwg.mxu0
    %vm225 = vcmask 64512
    %226 = vst.msk [vmem:[#allocation5] sm:$0xff] %vm225, %v220
    // Predicated region
    $region34: #{tpu_custom_call.1} parent=1 // pred_check
      _
    $region35: #{tpu_custom_call.1} parent=1 // pred_check_branch
      %228 = sbr.rel (0) target = $region37
    $region36: #{tpu_custom_call.1} parent=1 // pred_region
      %s230 = ssub.s32 128, 128
      %231 = vsyncadd [#allocation4], %s230
      %s233 = sshll.u32 [#allocation5], 4
      %s234 = int_to_ptr.vmem [resolvable:$true] %s233
      %236 = dma.vmem_to_hbm [thread:$0]  %s234, 128, %s7, [#allocation4]
    $region37: #{tpu_custom_call.1} parent=1 // pred_fallthru
      _
    // Predicated region
    $region38: #{tpu_custom_call.1} parent=1 // pred_check
      _
    $region39: #{tpu_custom_call.1} parent=1 // pred_check_branch
      %238 = sbr.rel (0) target = $region41
    $region40: #{tpu_custom_call.1} parent=1 // pred_region
      %239 = dma.done [#allocation4], 128
    $region41: #{tpu_custom_call.1} parent=1 // pred_fallthru
      _
    %240 = vsyncpa [#allocation3], 1
    %241 = vsyncpa [#allocation4], 1

</llo_original>
